<compile_context>
chip_gen: v7x
topology: tpu7x:2x2x1
jax: 0.10.0
libtpu: 0.0.40
codegen_flags: <defaults>
</compile_context>

<pallas_src>
import functools
import math

import jax
import jax.numpy as jnp
from jax.experimental import pallas as pl
from jax.experimental.pallas import tpu as pltpu


def _make_elman_kernel(num_layers: int, hidden: int, input_size: int,
                       use_bf16: bool):
    """Builds the fused Elman-net forward kernel for a fixed layer count."""

    def kernel(x_ref, h0_ref, w_ref, vb_ref, bo_ref,   # inputs
               out_ref, hseq_ref,                      # outputs
               comb_ref):                              # VMEM scratch
        H = hidden
        # combined = [h | x]; h sits at lane offset 0 so the per-layer rewrite
        # touches only the first H lanes; the x lanes are written once.
        comb_ref[:, H:H + input_size] = x_ref[...]     # x lanes, once
        comb_ref[:, 0:H] = h0_ref[...]                 # h lanes, layer 0

        h = h0_ref[...]
        for i in range(num_layers):                    # statically unrolled
            w = w_ref[i]                               # (H + input_size, H)
            b = vb_ref[i]                              # (1, H)
            combined = comb_ref[...]                   # (B, H + input_size)
            if use_bf16:
                pre = jnp.dot(combined.astype(jnp.bfloat16),
                              w.astype(jnp.bfloat16),
                              preferred_element_type=jnp.float32)
            else:
                pre = jnp.dot(combined, w,
                              preferred_element_type=jnp.float32)
            h = jnp.tanh(pre + b)                      # bias + tanh in f32
            hseq_ref[i] = h                            # stacked hidden output
            if i + 1 < num_layers:
                comb_ref[:, 0:H] = h                   # only h lanes change

        # Output head: h_last @ Wo^T + bo as VPU multiply + lane reduction
        # (avoids an N=1 MXU pass); bo comes from SMEM.
        wo = vb_ref[num_layers]                        # (1, H)
        out_ref[...] = (jnp.sum(h * wo, axis=-1, keepdims=True)
                        + bo_ref[0, 0])

    return kernel


@functools.partial(jax.jit, static_argnames=("num_layers", "use_bf16"))
def elman_forward(x, h0, w_slab, vb_slab, bo, *, num_layers, use_bf16=False):
    """Runs the ElmanNet forward pass as a single fused Pallas kernel.

    Args:
      x:       (B, 2)  f32 input.
      h0:      (B, H)  f32 = hidden_states[0].
      w_slab:  (L, H+2, H) packed per-layer weights ([Wh^T ; Wx^T]).
      vb_slab: (L+1, 1, H) rows 0..L-1 = layer biases, row L = output-head row.
      bo:      (1, 1) f32 output-head bias (lives in SMEM).
    Returns:
      (output (B, 1), [h_next_0 (B, H), ..., h_next_{L-1} (B, H)])
    """
    B, input_size = x.shape
    H = h0.shape[1]
    dt = jnp.float32

    vmem = pl.BlockSpec(memory_space=pltpu.MemorySpace.VMEM)
    smem = pl.BlockSpec(memory_space=pltpu.MemorySpace.SMEM)

    out, hseq = pl.pallas_call(
        _make_elman_kernel(num_layers, H, input_size, use_bf16),
        out_shape=(jax.ShapeDtypeStruct((B, 1), dt),
                   jax.ShapeDtypeStruct((num_layers, B, H), dt)),
        in_specs=[vmem, vmem, vmem, vmem, smem],
        out_specs=(vmem, vmem),
        scratch_shapes=[pltpu.VMEM((B, H + input_size), dt)],
    )(x, h0, w_slab, vb_slab, bo)

    return out, [hseq[i] for i in range(num_layers)]


# ---------------------------------------------------------------------------
# Parameter construction (PyTorch nn.Linear layout) and packing for the kernel
# ---------------------------------------------------------------------------

def init_torch_params(key, hidden_sizes, input_size=2, output_size=1):
    """nn.Linear-style params: W is (out, in) with in = [x | h], b is (out,)."""
    layers = []
    for h in hidden_sizes:
        fan_in = input_size + h
        bound = 1.0 / math.sqrt(fan_in)
        key, kw, kb = jax.random.split(key, 3)
        W = jax.random.uniform(kw, (h, fan_in), jnp.float32, -bound, bound)
        b = jax.random.uniform(kb, (h,), jnp.float32, -bound, bound)
        layers.append((W, b))
    fan_in = hidden_sizes[-1]
    bound = 1.0 / math.sqrt(fan_in)
    key, kw, kb = jax.random.split(key, 3)
    Wo = jax.random.uniform(kw, (output_size, fan_in), jnp.float32, -bound, bound)
    bo = jax.random.uniform(kb, (output_size,), jnp.float32, -bound, bound)
    return layers, (Wo, bo)


def pack_params(layer_params, head_params, input_size=2):
    """Packs PyTorch-layout params into the two kernel slabs + SMEM scalar."""
    H = layer_params[0][0].shape[0]
    w_rows, b_rows = [], []
    for W, b in layer_params:
        # cat([x, h], 1) @ W.T + b  ==  [h | x] @ [Wh^T ; Wx^T] + b
        wh_t = jnp.transpose(W[:, input_size:])            # (H, H)
        wx_t = jnp.transpose(W[:, :input_size])            # (input_size, H)
        w_rows.append(jnp.concatenate([wh_t, wx_t], axis=0))
        b_rows.append(b.reshape(1, H))
    Wo, bo = head_params
    w_slab = jnp.stack(w_rows, axis=0)                     # (L, H+in, H)
    vb_slab = jnp.stack(b_rows + [Wo.reshape(1, H)], axis=0)  # (L+1, 1, H)
    bo_smem = bo.reshape(1, 1).astype(jnp.float32)
    return w_slab, vb_slab, bo_smem


# ---------------------------------------------------------------------------
# Pure-JAX references (for verification)
# ---------------------------------------------------------------------------

def reference_forward_torch(x, hidden_states, layer_params, head_params):
    """Faithful transcription of the PyTorch ElmanNet.forward."""
    combined = jnp.concatenate([x, hidden_states[0]], axis=1)
    hidden_next = []
    for W, b in layer_params:
        h = jnp.tanh(combined @ W.T + b)
        combined = jnp.concatenate([x, h], axis=1)
        hidden_next.append(h)
    Wo, bo = head_params
    return hidden_next[-1] @ Wo.T + bo, hidden_next


def reference_forward_packed(x, h0, w_slab, vb_slab, bo, num_layers):
    """Pure-JAX mirror of the kernel's packed math (tight-tolerance check)."""
    h = h0
    hidden_next = []
    for i in range(num_layers):
        combined = jnp.concatenate([h, x], axis=1)
        h = jnp.tanh(combined @ w_slab[i] + vb_slab[i])
        hidden_next.append(h)
    out = jnp.sum(h * vb_slab[num_layers], axis=-1, keepdims=True) + bo[0, 0]
    return out, hidden_next


if __name__ == "__main__":
    batch = 8
    hidden_sizes = (32, 32)   # forward() semantics require equal hidden sizes
    num_layers = len(hidden_sizes)
    input_size = 2

    key = jax.random.PRNGKey(0)
    key, kx = jax.random.split(key)
    x = jax.random.normal(kx, (batch, input_size), jnp.float32)
    # init_hidden: zeros for every layer's hidden state
    hidden_states = [jnp.zeros((batch, h), jnp.float32) for h in hidden_sizes]

    layer_params, head_params = init_torch_params(key, hidden_sizes, input_size)
    w_slab, vb_slab, bo = pack_params(layer_params, head_params, input_size)

    out, hidden_next = elman_forward(x, hidden_states[0], w_slab, vb_slab, bo,
                                     num_layers=num_layers)
    jax.block_until_ready(out)
    jax.block_until_ready(hidden_next)

    assert out.shape == (batch, 1)
    assert len(hidden_next) == num_layers
    assert all(h.shape == (batch, hidden_sizes[i])
               for i, h in enumerate(hidden_next))

    # 1) Tight check against a pure-JAX mirror of the kernel's packed math.
    pk_out, pk_hidden = reference_forward_packed(
        x, hidden_states[0], w_slab, vb_slab, bo, num_layers)
    assert jnp.allclose(out, pk_out, atol=1e-4, rtol=1e-4)
    for h, hr in zip(hidden_next, pk_hidden):
        assert jnp.allclose(h, hr, atol=1e-4, rtol=1e-4)

    # 2) Semantics check against a faithful transcription of the PyTorch
    #    forward (looser tolerance: under default TPU matmul precision the
    #    XLA reference and the Mosaic kernel may use different f32/bf16 MXU
    #    pass counts and accumulate in different orders).
    th_out, th_hidden = reference_forward_torch(
        x, hidden_states, layer_params, head_params)
    assert jnp.allclose(out, th_out, atol=1e-2, rtol=1e-2)
    for h, hr in zip(hidden_next, th_hidden):
        assert jnp.allclose(h, hr, atol=1e-2, rtol=1e-2)

    print("KERNEL_OK")
</pallas_src>

<mosaic_0001>
module attributes {stable_mosaic.version = 11 : i64} {
  func.func @kernel(%arg0: memref<8x2xf32, #tpu.memory_space<vmem>>, %arg1: memref<8x32xf32, #tpu.memory_space<vmem>>, %arg2: memref<2x34x32xf32, #tpu.memory_space<vmem>>, %arg3: memref<3x1x32xf32, #tpu.memory_space<vmem>>, %arg4: memref<1x1xf32, #tpu.memory_space<smem>>, %arg5: memref<8x1xf32, #tpu.memory_space<vmem>>, %arg6: memref<2x8x32xf32, #tpu.memory_space<vmem>>, %arg7: memref<8x34xf32, #tpu.memory_space<vmem>>) attributes {dimension_semantics = [], scalar_prefetch = 0 : i64, scratch_operands = 1 : i64, tpu.core_type = #tpu.core_type<tc>} {
    %c0 = arith.constant 0 : index
    %c0_0 = arith.constant 0 : index
    %0 = vector.load %arg0[%c0, %c0_0] : memref<8x2xf32, #tpu.memory_space<vmem>>, vector<8x2xf32>
    %c0_1 = arith.constant 0 : index
    %c32 = arith.constant 32 : index
    %1 = vector.load %arg7[%c0_1, %c32] : memref<8x34xf32, #tpu.memory_space<vmem>>, vector<8x2xf32>
    tpu.vector_store %arg7[%c0_1, %c32], %0 {strides = array<i32>} : memref<8x34xf32, #tpu.memory_space<vmem>>, vector<8x2xf32>,
    %c0_2 = arith.constant 0 : index
    %c0_3 = arith.constant 0 : index
    %2 = vector.load %arg1[%c0_2, %c0_3] : memref<8x32xf32, #tpu.memory_space<vmem>>, vector<8x32xf32>
    %c0_4 = arith.constant 0 : index
    %c0_5 = arith.constant 0 : index
    %3 = vector.load %arg7[%c0_4, %c0_5] : memref<8x34xf32, #tpu.memory_space<vmem>>, vector<8x32xf32>
    tpu.vector_store %arg7[%c0_4, %c0_5], %2 {strides = array<i32>} : memref<8x34xf32, #tpu.memory_space<vmem>>, vector<8x32xf32>,
    %c0_6 = arith.constant 0 : index
    %c0_7 = arith.constant 0 : index
    %c0_8 = arith.constant 0 : index
    %4 = vector.load %arg2[%c0_6, %c0_7, %c0_8] : memref<2x34x32xf32, #tpu.memory_space<vmem>>, vector<1x34x32xf32>
    %5 = vector.shape_cast %4 : vector<1x34x32xf32> to vector<34x32xf32>
    %c0_9 = arith.constant 0 : index
    %c0_10 = arith.constant 0 : index
    %c0_11 = arith.constant 0 : index
    %6 = vector.load %arg3[%c0_9, %c0_10, %c0_11] : memref<3x1x32xf32, #tpu.memory_space<vmem>>, vector<1x1x32xf32>
    %7 = vector.shape_cast %6 : vector<1x1x32xf32> to vector<1x32xf32>
    %c0_12 = arith.constant 0 : index
    %c0_13 = arith.constant 0 : index
    %8 = vector.load %arg7[%c0_12, %c0_13] : memref<8x34xf32, #tpu.memory_space<vmem>>, vector<8x34xf32>
    %cst = arith.constant dense<0.000000e+00> : vector<8x32xf32>
    %9 = tpu.matmul %8, %5, %cst {dimension_numbers = #tpu.dot_dimension_numbers<[1], [0], [0], [1], [0, 0, 1, 1], [], []>} : vector<8x34xf32>, vector<34x32xf32>, vector<8x32xf32> -> vector<8x32xf32>
    %10 = vector.broadcast %7 : vector<1x32xf32> to vector<8x32xf32>
    %11 = arith.addf %9, %10 : vector<8x32xf32>
    %12 = math.tanh %11 : vector<8x32xf32>
    %c0_14 = arith.constant 0 : index
    %c0_15 = arith.constant 0 : index
    %c0_16 = arith.constant 0 : index
    %13 = vector.load %arg6[%c0_14, %c0_15, %c0_16] : memref<2x8x32xf32, #tpu.memory_space<vmem>>, vector<1x8x32xf32>
    %14 = vector.shape_cast %13 : vector<1x8x32xf32> to vector<8x32xf32>
    %15 = vector.shape_cast %12 : vector<8x32xf32> to vector<1x8x32xf32>
    tpu.vector_store %arg6[%c0_14, %c0_15, %c0_16], %15 {strides = array<i32>} : memref<2x8x32xf32, #tpu.memory_space<vmem>>, vector<1x8x32xf32>,
    %c0_17 = arith.constant 0 : index
    %c0_18 = arith.constant 0 : index
    %16 = vector.load %arg7[%c0_17, %c0_18] : memref<8x34xf32, #tpu.memory_space<vmem>>, vector<8x32xf32>
    tpu.vector_store %arg7[%c0_17, %c0_18], %12 {strides = array<i32>} : memref<8x34xf32, #tpu.memory_space<vmem>>, vector<8x32xf32>,
    %c1 = arith.constant 1 : index
    %c0_19 = arith.constant 0 : index
    %c0_20 = arith.constant 0 : index
    %17 = vector.load %arg2[%c1, %c0_19, %c0_20] : memref<2x34x32xf32, #tpu.memory_space<vmem>>, vector<1x34x32xf32>
    %18 = vector.shape_cast %17 : vector<1x34x32xf32> to vector<34x32xf32>
    %c1_21 = arith.constant 1 : index
    %c0_22 = arith.constant 0 : index
    %c0_23 = arith.constant 0 : index
    %19 = vector.load %arg3[%c1_21, %c0_22, %c0_23] : memref<3x1x32xf32, #tpu.memory_space<vmem>>, vector<1x1x32xf32>
    %20 = vector.shape_cast %19 : vector<1x1x32xf32> to vector<1x32xf32>
    %c0_24 = arith.constant 0 : index
    %c0_25 = arith.constant 0 : index
    %21 = vector.load %arg7[%c0_24, %c0_25] : memref<8x34xf32, #tpu.memory_space<vmem>>, vector<8x34xf32>
    %cst_26 = arith.constant dense<0.000000e+00> : vector<8x32xf32>
    %22 = tpu.matmul %21, %18, %cst_26 {dimension_numbers = #tpu.dot_dimension_numbers<[1], [0], [0], [1], [0, 0, 1, 1], [], []>} : vector<8x34xf32>, vector<34x32xf32>, vector<8x32xf32> -> vector<8x32xf32>
    %23 = vector.broadcast %20 : vector<1x32xf32> to vector<8x32xf32>
    %24 = arith.addf %22, %23 : vector<8x32xf32>
    %25 = math.tanh %24 : vector<8x32xf32>
    %c1_27 = arith.constant 1 : index
    %c0_28 = arith.constant 0 : index
    %c0_29 = arith.constant 0 : index
    %26 = vector.load %arg6[%c1_27, %c0_28, %c0_29] : memref<2x8x32xf32, #tpu.memory_space<vmem>>, vector<1x8x32xf32>
    %27 = vector.shape_cast %26 : vector<1x8x32xf32> to vector<8x32xf32>
    %28 = vector.shape_cast %25 : vector<8x32xf32> to vector<1x8x32xf32>
    tpu.vector_store %arg6[%c1_27, %c0_28, %c0_29], %28 {strides = array<i32>} : memref<2x8x32xf32, #tpu.memory_space<vmem>>, vector<1x8x32xf32>,
    %c2 = arith.constant 2 : index
    %c0_30 = arith.constant 0 : index
    %c0_31 = arith.constant 0 : index
    %29 = vector.load %arg3[%c2, %c0_30, %c0_31] : memref<3x1x32xf32, #tpu.memory_space<vmem>>, vector<1x1x32xf32>
    %30 = vector.shape_cast %29 : vector<1x1x32xf32> to vector<1x32xf32>
    %31 = vector.broadcast %30 : vector<1x32xf32> to vector<8x32xf32>
    %32 = arith.mulf %25, %31 : vector<8x32xf32>
    %cst_32 = arith.constant dense<0.000000e+00> : vector<8xf32>
    %33 = vector.multi_reduction <add>, %32, %cst_32 [1] : vector<8x32xf32> to vector<8xf32>
    %34 = vector.shape_cast %33 : vector<8xf32> to vector<8x1xf32>
    %c0_33 = arith.constant 0 : index
    %c0_34 = arith.constant 0 : index
    %35 = memref.load %arg4[%c0_33, %c0_34] : memref<1x1xf32, #tpu.memory_space<smem>>
    %36 = vector.broadcast %35 : f32 to vector<8x1xf32>
    %37 = arith.addf %34, %36 : vector<8x1xf32>
    %c0_35 = arith.constant 0 : index
    %c0_36 = arith.constant 0 : index
    %38 = vector.load %arg5[%c0_35, %c0_36] : memref<8x1xf32, #tpu.memory_space<vmem>>, vector<8x1xf32>
    tpu.vector_store %arg5[%c0_35, %c0_36], %37 {strides = array<i32>} : memref<8x1xf32, #tpu.memory_space<vmem>>, vector<8x1xf32>,
    return
  }
}

</mosaic_0001>

<llo_original>
// kernel: elman_forward.1
$region0: #{elman_forward.1}
  #allocation0 [shape = 'u32[]', space=smem, size = 0x4, offset = 0x4, fixed_abs, tag = 'smem constant byte address 0x4 - core index']
  #allocation1 [shape = 'u32[144,128]{1,0:T(1,128)}', space=vmem, size = 0x12000, scoped, tag = 'internal scratch']
  #allocation2 [shape = 'f32[8,34]{1,0:T(8,128)}', space=vmem, size = 0x1000, scoped, tag = 'scratch operand']
  #allocation3 [shape = 'f32[1,1]{1,0:T(1,128)S(6)}', space=smem, size = 0x200, scoped, tag = 'scoped memory for elman_forward.1']
  %s0 = inlined_call_operand.vmem [shape: f32[8,2], index: 0, kind: input, shape index: {}]
  %s1 = inlined_call_operand.vmem [shape: f32[8,32], index: 1, kind: input, shape index: {}]
  %s2 = inlined_call_operand.vmem [shape: f32[2,34,32], index: 2, kind: input, shape index: {}]
  %s3 = inlined_call_operand.vmem [shape: f32[3,1,32], index: 3, kind: input, shape index: {}]
  %s4 = inlined_call_operand.<no memory space> [shape: f32[1,1], index: 4, kind: input, shape index: {}]
  %s5 = inlined_call_operand.vmem [shape: f32[8,1], index: 5, kind: output, shape index: {0}]
  %s6 = inlined_call_operand.vmem [shape: f32[2,8,32], index: 6, kind: output, shape index: {1}]
  %7 = xla_tuple %s5, %s6
  %s8 = sld [smem:[#allocation0]]
  $region38: #{elman_forward.1} parent=0
    _
  %s10 = ssub.s32 1, %s8
  %s11 = scalar_select 0, %s10, %s8
  %12 = sst [smem:[#allocation3]] %s4
  // Predicated region
  $region2: #{elman_forward.1} parent=0 // pred_check
    _
  $region3: #{elman_forward.1} parent=0 // pred_check_branch
    %14 = sbr.rel (0) target = $region5
  $region4: #{elman_forward.1} parent=0 // pred_region
    _
  $region5: #{elman_forward.1} parent=0 // pred_fallthru
    _
  // Predicated region
  $region6: #{elman_forward.1} parent=0 // pred_check
    _
  $region7: #{elman_forward.1} parent=0 // pred_check_branch
    %16 = sbr.rel (0) target = $region9
  $region8: #{elman_forward.1} parent=0 // pred_region
    _
  $region9: #{elman_forward.1} parent=0 // pred_fallthru
    _
  // Predicated region
  $region10: #{elman_forward.1} parent=0 // pred_check
    _
  $region11: #{elman_forward.1} parent=0 // pred_check_branch
    %18 = sbr.rel (0) target = $region13
  $region12: #{elman_forward.1} parent=0 // pred_region
    _
  $region13: #{elman_forward.1} parent=0 // pred_fallthru
    _
  // Predicated region
  $region14: #{elman_forward.1} parent=0 // pred_check
    _
  $region15: #{elman_forward.1} parent=0 // pred_check_branch
    %20 = sbr.rel (0) target = $region17
  $region16: #{elman_forward.1} parent=0 // pred_region
    _
  $region17: #{elman_forward.1} parent=0 // pred_fallthru
    _
  // Predicated region
  $region18: #{elman_forward.1} parent=0 // pred_check
    _
  $region19: #{elman_forward.1} parent=0 // pred_check_branch
    %22 = sbr.rel (0) target = $region21
  $region20: #{elman_forward.1} parent=0 // pred_region
    _
  $region21: #{elman_forward.1} parent=0 // pred_fallthru
    _
  %v23 = vld [vmem:[%s0] sm:$0xff]
  %25 = vrot.lane.b32.xlu0 %v23, 32
  %v26 = vpop.permute.xlu0 %25
  %vm28 = vcmask 277760
  %29 = vst.msk [vmem:[#allocation2] sm:$0xff] %vm28, %v26
  %v30 = vld [vmem:[%s1] sm:$0xff]
  %vm31 = vcmask 261120
  %32 = vst.msk [vmem:[#allocation2] sm:$0xff] %vm31, %v30
  %v33 = vld [vmem:[%s2] sm:$0xff]
  %v34 = vld [vmem:[%s2 + $0x8] sm:$0xff]
  %v35 = vld [vmem:[%s2 + $0x10] sm:$0xff]
  %v36 = vld [vmem:[%s2 + $0x18] sm:$0xff]
  %v37 = vld [vmem:[%s2 + $0x20] sm:$0x3]
  %v38 = vld [vmem:[%s3] sm:$0x1]
  %v39 = vld [vmem:[#allocation2] sm:$0xff]
  %v41 = vlaneseq
  %v42 = vshrl.u32 %v41, 7
  %v43 = vsub.s32 0, %v42
  %v44 = vrot.slane %v38, %v43
  %vm46 = vcmask 277504
  %v48 = vsel %vm46, %v39, 0
  %vm50 = vcmask 1041408
  %v52 = vsel %vm50, %v37, 0
  %54 = vmatprep.subr.mxu0 0.0
  %55 = vmatpush1.msra.mxu0 %v33
  %56 = vmatprep.subr.mxu0 0.0
  %57 = vmatpush1.msra.mxu0 %v34
  %58 = vmatprep.subr.mxu0 0.0
  %59 = vmatpush1.msra.mxu0 %v35
  %60 = vmatprep.subr.mxu0 0.0
  %61 = vmatpush1.msra.mxu0 %v36
  %62 = vmatprep.subr.mxu0 0.0
  %63 = vmatpush1.msra.mxu0 %v52
  %64 = vmatprep.subr.mxu0 0.0
  %65 = vmatpush1.msra.mxu0 0.0
  %66 = vmatprep.subr.mxu0 0.0
  %67 = vmatpush1.msra.mxu0 0.0
  %68 = vmatprep.subr.mxu0 0.0
  %69 = vmatpush1.msra.mxu0 0.0
  %70 = vmatprep.subr.mxu0 0.0
  %71 = vmatpush1.msra.mxu0 0.0
  %72 = vmatprep.subr.mxu0 0.0
  %73 = vmatpush1.msra.mxu0 0.0
  %74 = vmatprep.subr.mxu0 0.0
  %75 = vmatpush1.msra.mxu0 0.0
  %76 = vmatprep.subr.mxu0 0.0
  %77 = vmatpush1.msra.mxu0 0.0
  %78 = vmatprep.subr.mxu0 0.0
  %79 = vmatpush1.msra.mxu0 0.0
  %80 = vmatprep.subr.mxu0 0.0
  %81 = vmatpush1.msra.mxu0 0.0
  %82 = vmatprep.subr.mxu0 0.0
  %83 = vmatpush1.msra.mxu0 0.0
  %84 = vmatprep.subr.mxu0 0.0
  %85 = vmatpush1.msra.mxu0 0.0
  %86 = vmatprep.subr.mxu0 0.0
  %87 = vmatpush1.msra.mxu0 0.0
  %88 = vmatprep.subr.mxu0 0.0
  %89 = vmatpush1.msra.mxu0 0.0
  %90 = vmatprep.subr.mxu0 0.0
  %91 = vmatpush1.msra.mxu0 0.0
  %92 = vmatprep.subr.mxu0 0.0
  %93 = vmatpush1.msra.mxu0 0.0
  %94 = vmatprep.subr.mxu0 0.0
  %95 = vmatpush1.msra.mxu0 0.0
  %96 = vmatprep.subr.mxu0 0.0
  %97 = vmatpush1.msra.mxu0 0.0
  %98 = vmatprep.subr.mxu0 0.0
  %99 = vmatpush1.msra.mxu0 0.0
  %100 = vmatprep.subr.mxu0 0.0
  %101 = vmatpush1.msra.mxu0 0.0
  %102 = vmatprep.subr.mxu0 0.0
  %103 = vmatpush1.msra.mxu0 0.0
  %104 = vmatprep.subr.mxu0 0.0
  %105 = vmatpush1.msra.mxu0 0.0
  %106 = vmatprep.subr.mxu0 0.0
  %107 = vmatpush1.msra.mxu0 0.0
  %108 = vmatprep.subr.mxu0 0.0
  %109 = vmatpush1.msra.mxu0 0.0
  %110 = vmatprep.subr.mxu0 0.0
  %111 = vmatpush1.msra.mxu0 0.0
  %112 = vmatprep.subr.mxu0 0.0
  %113 = vmatpush1.msra.mxu0 0.0
  %114 = vmatprep.subr.mxu0 0.0
  %115 = vmatpush1.msra.mxu0 0.0
  %116 = vmatprep.subr.mxu0 0.0
  %117 = vmatpush1.msra.mxu0 0.0
  %118 = vmatprep.mubr.f32.mxu0 0.0
  %119 = vmatmul.mubr.f32.gmra.mrb[0].mxu0 %v48
  %v120 = vpop.f32.mrb[0].mxu0
  %v121 = vadd.f32 %v44, %v120
  %v122 = vpop.f32.mrb[0].mxu0
  %123 = vdwg.mxu0
  %v124 = vtanh.pop %v121
  %125 = vst.msk [vmem:[%s6] sm:$0xff] %vm31, %v124
  %126 = vst.msk [vmem:[#allocation2] sm:$0xff] %vm31, %v124
  %s127 = scalar_lea.vmem %s2, 40
  %v128 = vld [vmem:[%s127] sm:$0xff]
  %v129 = vld [vmem:[%s127 + $0x8] sm:$0xff]
  %v130 = vld [vmem:[%s127 + $0x10] sm:$0xff]
  %v131 = vld [vmem:[%s127 + $0x18] sm:$0xff]
  %v132 = vld [vmem:[%s127 + $0x20] sm:$0x3]
  %s133 = scalar_lea.vmem %s3, 1
  %v134 = vld [vmem:[%s133] sm:$0x1]
  %v135 = vld [vmem:[#allocation2] sm:$0xff]
  %v137 = vlaneseq
  %v138 = vshrl.u32 %v137, 7
  %v139 = vsub.s32 0, %v138
  %v140 = vrot.slane %v134, %v139
  %v143 = vsel %vm46, %v135, 0
  %v146 = vsel %vm50, %v132, 0
  %148 = vmatprep.subr.mxu0 0.0
  %149 = vmatpush1.msra.mxu0 %v128
  %150 = vmatprep.subr.mxu0 0.0
  %151 = vmatpush1.msra.mxu0 %v129
  %152 = vmatprep.subr.mxu0 0.0
  %153 = vmatpush1.msra.mxu0 %v130
  %154 = vmatprep.subr.mxu0 0.0
  %155 = vmatpush1.msra.mxu0 %v131
  %156 = vmatprep.subr.mxu0 0.0
  %157 = vmatpush1.msra.mxu0 %v146
  %158 = vmatprep.subr.mxu0 0.0
  %159 = vmatpush1.msra.mxu0 0.0
  %160 = vmatprep.subr.mxu0 0.0
  %161 = vmatpush1.msra.mxu0 0.0
  %162 = vmatprep.subr.mxu0 0.0
  %163 = vmatpush1.msra.mxu0 0.0
  %164 = vmatprep.subr.mxu0 0.0
  %165 = vmatpush1.msra.mxu0 0.0
  %166 = vmatprep.subr.mxu0 0.0
  %167 = vmatpush1.msra.mxu0 0.0
  %168 = vmatprep.subr.mxu0 0.0
  %169 = vmatpush1.msra.mxu0 0.0
  %170 = vmatprep.subr.mxu0 0.0
  %171 = vmatpush1.msra.mxu0 0.0
  %172 = vmatprep.subr.mxu0 0.0
  %173 = vmatpush1.msra.mxu0 0.0
  %174 = vmatprep.subr.mxu0 0.0
  %175 = vmatpush1.msra.mxu0 0.0
  %176 = vmatprep.subr.mxu0 0.0
  %177 = vmatpush1.msra.mxu0 0.0
  %178 = vmatprep.subr.mxu0 0.0
  %179 = vmatpush1.msra.mxu0 0.0
  %180 = vmatprep.subr.mxu0 0.0
  %181 = vmatpush1.msra.mxu0 0.0
  %182 = vmatprep.subr.mxu0 0.0
  %183 = vmatpush1.msra.mxu0 0.0
  %184 = vmatprep.subr.mxu0 0.0
  %185 = vmatpush1.msra.mxu0 0.0
  %186 = vmatprep.subr.mxu0 0.0
  %187 = vmatpush1.msra.mxu0 0.0
  %188 = vmatprep.subr.mxu0 0.0
  %189 = vmatpush1.msra.mxu0 0.0
  %190 = vmatprep.subr.mxu0 0.0
  %191 = vmatpush1.msra.mxu0 0.0
  %192 = vmatprep.subr.mxu0 0.0
  %193 = vmatpush1.msra.mxu0 0.0
  %194 = vmatprep.subr.mxu0 0.0
  %195 = vmatpush1.msra.mxu0 0.0
  %196 = vmatprep.subr.mxu0 0.0
  %197 = vmatpush1.msra.mxu0 0.0
  %198 = vmatprep.subr.mxu0 0.0
  %199 = vmatpush1.msra.mxu0 0.0
  %200 = vmatprep.subr.mxu0 0.0
  %201 = vmatpush1.msra.mxu0 0.0
  %202 = vmatprep.subr.mxu0 0.0
  %203 = vmatpush1.msra.mxu0 0.0
  %204 = vmatprep.subr.mxu0 0.0
  %205 = vmatpush1.msra.mxu0 0.0
  %206 = vmatprep.subr.mxu0 0.0
  %207 = vmatpush1.msra.mxu0 0.0
  %208 = vmatprep.subr.mxu0 0.0
  %209 = vmatpush1.msra.mxu0 0.0
  %210 = vmatprep.subr.mxu0 0.0
  %211 = vmatpush1.msra.mxu0 0.0
  %212 = vmatprep.mubr.f32.mxu0 0.0
  %213 = vmatmul.mubr.f32.gmra.mrb[0].mxu0 %v143
  %v214 = vpop.f32.mrb[0].mxu0
  %v215 = vadd.f32 %v140, %v214
  %v216 = vpop.f32.mrb[0].mxu0
  %217 = vdwg.mxu0
  %v218 = vtanh.pop %v215
  %s219 = scalar_lea.vmem %s6, 8
  %220 = vst.msk [vmem:[%s219] sm:$0xff] %vm31, %v218
  %s221 = scalar_lea.vmem %s3, 2
  %v222 = vld [vmem:[%s221] sm:$0x1]
  %v224 = vlaneseq
  %v225 = vshrl.u32 %v224, 7
  %v226 = vsub.s32 0, %v225
  %v227 = vrot.slane %v222, %v226
  %v229 = vmul.f32 %v218, %v227
  %v230 = vsel %vm31, %v229, 0.0
  %231 = vadd.xlane.f32.xlu0 %v230
  %v232 = vpop.xlane.xlu0 %231
  %s233 = sld [smem:[#allocation3]]
  %v234 = vstv %s233
  %v235 = vadd.f32 %v232, %v234
  %vm236 = vcmask 7168
  %237 = vst.msk [vmem:[%s5] sm:$0xff] %vm236, %v235
  // Predicated region
  $region22: #{elman_forward.1} parent=0 // pred_check
    _
  $region23: #{elman_forward.1} parent=0 // pred_check_branch
    %239 = sbr.rel (0) target = $region25
  $region24: #{elman_forward.1} parent=0 // pred_region
    _
  $region25: #{elman_forward.1} parent=0 // pred_fallthru
    _
  // Predicated region
  $region26: #{elman_forward.1} parent=0 // pred_check
    _
  $region27: #{elman_forward.1} parent=0 // pred_check_branch
    %241 = sbr.rel (0) target = $region29
  $region28: #{elman_forward.1} parent=0 // pred_region
    _
  $region29: #{elman_forward.1} parent=0 // pred_fallthru
    _
  // Predicated region
  $region30: #{elman_forward.1} parent=0 // pred_check
    _
  $region31: #{elman_forward.1} parent=0 // pred_check_branch
    %243 = sbr.rel (0) target = $region33
  $region32: #{elman_forward.1} parent=0 // pred_region
    _
  $region33: #{elman_forward.1} parent=0 // pred_fallthru
    _
  // Predicated region
  $region34: #{elman_forward.1} parent=0 // pred_check
    _
  $region35: #{elman_forward.1} parent=0 // pred_check_branch
    %245 = sbr.rel (0) target = $region37
  $region36: #{elman_forward.1} parent=0 // pred_region
    _
  $region37: #{elman_forward.1} parent=0 // pred_fallthru
    _

</llo_original>
